<compile_context>
chip_gen: v6e
topology: v6e:2x2x1
jax: 0.10.0
libtpu: 0.0.40
codegen_flags: <defaults>
</compile_context>

<pallas_src>
import jax
import jax.numpy as jnp
from jax.experimental import pallas as pl
from jax.experimental.pallas import tpu as pltpu

KERNEL_SIZE = 3
DILATION = 2
PADDING = DILATION * (KERNEL_SIZE - 1) // 2   # = 2, same as the PyTorch module
LEFT = 128                                    # lane-aligned staging offset (>= PADDING)


def causal_conv1d_kernel(w_ref, b_ref, x_ref, o_ref, xpad_ref):
    # w_ref: (3,) f32 SMEM, b_ref: (1,) f32 SMEM
    # x_ref: (TN, L)      VMEM block of the *unpadded* input
    # o_ref: (TN, L-2)    VMEM output block
    # xpad_ref: (TN, LEFT+L) f32 VMEM scratch, used only for the shifted x[t-2] tap.
    tn, l_out = o_ref.shape
    length = x_ref.shape[1]

    # Stage the block at a 128-lane-aligned offset (aligned store; proven lowering).
    xpad_ref[:, LEFT:LEFT + length] = x_ref[...]

    w0 = w_ref[0]
    w1 = w_ref[1]
    w2 = w_ref[2]

    # tap1 = x[t], tap2 = x[t+2]: lane-offset loads straight from the input block.
    tap1 = x_ref[:, 0:l_out]
    tap2 = x_ref[:, PADDING:PADDING + l_out]

    # tap0 = x[t-2] with 2 causal zeros: shifted load from the staged scratch.
    base = LEFT - PADDING
    tap0 = xpad_ref[:, base:base + l_out]
    lane = jax.lax.broadcasted_iota(jnp.int32, (tn, l_out), 1)
    tap0 = jnp.where(lane >= PADDING, tap0, 0.0)  # zero the uninitialised scratch lanes

    acc = w0 * tap0                 # init from first tap (no separate bias splat)
    acc = acc + w1 * tap1
    acc = acc + w2 * tap2
    acc = acc + b_ref[0]            # scalar bias added once at the end
    o_ref[...] = acc.astype(o_ref.dtype)


_FOOTPRINT_BUDGET = 24 << 20   # VMEM bytes for (2x in + 2x out + 1x scratch) blocks


def _bytes_per_row(length, l_out):
    # Double-buffered input + double-buffered output + single staging-scratch row.
    return 2 * 4 * length + 2 * 4 * l_out + 4 * (LEFT + length)


def _row_tile(n, length, l_out):
    per_row = _bytes_per_row(length, l_out)
    tn = max(8, (_FOOTPRINT_BUDGET // max(per_row, 1)) // 8 * 8)
    if n >= 16:
        # Force >= 2 grid steps so the "parallel" row axis shards across both v7x TCs.
        half = -(-n // 2)
        half = -(-half // 8) * 8
        tn = min(tn, half)
    if tn >= n:
        return n        # single block with the full row dim (always a legal block shape)
    return tn


def causal_conv1d(x, weight, bias):
    """x: (N, 1, L) float32; weight: (1, 1, 3); bias: (1,). Returns (N, 1, L-2)."""
    n, c, length = x.shape
    assert c == 1
    assert length >= KERNEL_SIZE                 # need L_out >= 1
    l_out = (length + PADDING) - DILATION * (KERNEL_SIZE - 1)   # = length - 2

    x2d = x.reshape(n, length).astype(jnp.float32)   # drop the size-1 channel dim (free)
    w = weight.reshape(KERNEL_SIZE).astype(jnp.float32)
    b = bias.reshape(1).astype(jnp.float32)

    tn = _row_tile(n, length, l_out)
    grid = (pl.cdiv(n, tn),)

    footprint = tn * _bytes_per_row(length, l_out)
    vmem_limit = int(min(48 << 20,
                         max(16 << 20, footprint + footprint // 4 + (2 << 20))))

    cost = pl.CostEstimate(
        flops=6 * n * l_out,                     # 3 mul + 3 add per output element
        transcendentals=0,
        bytes_accessed=4 * (n * length + n * l_out),
    )

    out2d = pl.pallas_call(
        causal_conv1d_kernel,
        out_shape=jax.ShapeDtypeStruct((n, l_out), jnp.float32),
        grid=grid,
        in_specs=[
            pl.BlockSpec(memory_space=pltpu.MemorySpace.SMEM),   # weights (3,)
            pl.BlockSpec(memory_space=pltpu.MemorySpace.SMEM),   # bias (1,)
            pl.BlockSpec((tn, length), lambda i: (i, 0)),        # input row tile
        ],
        out_specs=pl.BlockSpec((tn, l_out), lambda i: (i, 0)),
        scratch_shapes=[pltpu.VMEM((tn, LEFT + length), jnp.float32)],
        compiler_params=pltpu.CompilerParams(
            dimension_semantics=("parallel",),
            vmem_limit_bytes=vmem_limit,
        ),
        cost_estimate=cost,
    )(w, b, x2d)

    return out2d.reshape(n, 1, l_out)


def reference_causal_conv1d(x, weight, bias):
    """Pure-JAX reference matching PyTorch Conv1d semantics (for verification)."""
    n, _, length = x.shape
    x_pad = jnp.pad(x[:, 0, :].astype(jnp.float32), ((0, 0), (PADDING, 0)))
    l_out = (length + PADDING) - DILATION * (KERNEL_SIZE - 1)
    out = jnp.full((n, l_out), bias[0], dtype=jnp.float32)
    w = weight.reshape(KERNEL_SIZE)
    for k in range(KERNEL_SIZE):
        out = out + w[k] * x_pad[:, k * DILATION:k * DILATION + l_out]
    return out.reshape(n, 1, l_out)


if __name__ == "__main__":
    key = jax.random.PRNGKey(0)
    kx, kw, kb, kx2 = jax.random.split(key, 4)

    # Conv1d(1, 1, 3) parameter shapes: weight (1,1,3), bias (1,)
    weight = jax.random.normal(kw, (1, 1, KERNEL_SIZE), dtype=jnp.float32) * 0.5
    bias = jax.random.normal(kb, (1,), dtype=jnp.float32) * 0.1

    # Primary small input consistent with the module: (batch=2, channels=1, seq=16).
    x = jax.random.normal(kx, (2, 1, 16), dtype=jnp.float32)
    out = jax.block_until_ready(causal_conv1d(x, weight, bias))
    ref = reference_causal_conv1d(x, weight, bias)
    assert out.shape == (2, 1, 14), out.shape
    assert jnp.allclose(out, ref, atol=1e-5, rtol=1e-5), "mismatch vs reference (small)"

    # Secondary check exercising the multi-step (megacore-splittable) grid and a ragged
    # last row block.
    x2 = jax.random.normal(kx2, (50, 1, 272), dtype=jnp.float32)
    out2 = jax.block_until_ready(causal_conv1d(x2, weight, bias))
    ref2 = reference_causal_conv1d(x2, weight, bias)
    assert out2.shape == (50, 1, 270), out2.shape
    assert jnp.allclose(out2, ref2, atol=1e-5, rtol=1e-5), "mismatch vs reference (tiled)"

    print("KERNEL_OK")
</pallas_src>

<mosaic_0001>
module attributes {stable_mosaic.version = 11 : i64} {
  func.func @causal_conv1d_kernel(%arg0: i32, %arg1: memref<3xf32, #tpu.memory_space<smem>>, %arg2: memref<1xf32, #tpu.memory_space<smem>>, %arg3: memref<2x16xf32, #tpu.memory_space<vmem>>, %arg4: memref<2x14xf32, #tpu.memory_space<vmem>>, %arg5: memref<2x144xf32, #tpu.memory_space<vmem>>) attributes {dimension_semantics = [#tpu.dimension_semantics<parallel>], iteration_bounds = array<i64: 1>, scalar_prefetch = 0 : i64, scratch_operands = 1 : i64, tpu.core_type = #tpu.core_type<tc>, window_params = [{transform_indices = @transform_0, window_bounds = array<i64: 3>}, {transform_indices = @transform_1, window_bounds = array<i64: 1>}, {transform_indices = @transform_2, window_bounds = array<i64: 2, 16>}, {transform_indices = @transform_3, window_bounds = array<i64: 2, 14>}]} {
    %c0 = arith.constant 0 : index
    %c0_0 = arith.constant 0 : index
    %0 = vector.load %arg3[%c0, %c0_0] : memref<2x16xf32, #tpu.memory_space<vmem>>, vector<2x16xf32>
    %c0_1 = arith.constant 0 : index
    %c128 = arith.constant 128 : index
    %1 = vector.load %arg5[%c0_1, %c128] : memref<2x144xf32, #tpu.memory_space<vmem>>, vector<2x16xf32>
    tpu.vector_store %arg5[%c0_1, %c128], %0 {strides = array<i32>} : memref<2x144xf32, #tpu.memory_space<vmem>>, vector<2x16xf32>,
    %c0_2 = arith.constant 0 : index
    %2 = memref.load %arg1[%c0_2] : memref<3xf32, #tpu.memory_space<smem>>
    %c1 = arith.constant 1 : index
    %3 = memref.load %arg1[%c1] : memref<3xf32, #tpu.memory_space<smem>>
    %c2 = arith.constant 2 : index
    %4 = memref.load %arg1[%c2] : memref<3xf32, #tpu.memory_space<smem>>
    %c0_3 = arith.constant 0 : index
    %c0_4 = arith.constant 0 : index
    %5 = vector.load %arg3[%c0_3, %c0_4] : memref<2x16xf32, #tpu.memory_space<vmem>>, vector<2x14xf32>
    %c0_5 = arith.constant 0 : index
    %c2_6 = arith.constant 2 : index
    %6 = vector.load %arg3[%c0_5, %c2_6] : memref<2x16xf32, #tpu.memory_space<vmem>>, vector<2x14xf32>
    %c0_7 = arith.constant 0 : index
    %c126 = arith.constant 126 : index
    %7 = vector.load %arg5[%c0_7, %c126] : memref<2x144xf32, #tpu.memory_space<vmem>>, vector<2x14xf32>
    %8 = tpu.iota {dimensions = array<i32: 1>} : vector<2x14xi32>
    %c2_i32 = arith.constant 2 : i32
    %9 = vector.broadcast %c2_i32 : i32 to vector<2x14xi32>
    %10 = arith.cmpi sge, %8, %9 : vector<2x14xi32>
    %cst = arith.constant 0.000000e+00 : f32
    %11 = vector.broadcast %cst : f32 to vector<2x14xf32>
    %12 = arith.select %10, %7, %11 : vector<2x14xi1>, vector<2x14xf32>
    %13 = vector.broadcast %2 : f32 to vector<2x14xf32>
    %14 = arith.mulf %13, %12 : vector<2x14xf32>
    %15 = vector.broadcast %3 : f32 to vector<2x14xf32>
    %16 = arith.mulf %15, %5 : vector<2x14xf32>
    %17 = arith.addf %14, %16 : vector<2x14xf32>
    %18 = vector.broadcast %4 : f32 to vector<2x14xf32>
    %19 = arith.mulf %18, %6 : vector<2x14xf32>
    %20 = arith.addf %17, %19 : vector<2x14xf32>
    %c0_8 = arith.constant 0 : index
    %21 = memref.load %arg2[%c0_8] : memref<1xf32, #tpu.memory_space<smem>>
    %22 = vector.broadcast %21 : f32 to vector<2x14xf32>
    %23 = arith.addf %20, %22 : vector<2x14xf32>
    %c0_9 = arith.constant 0 : index
    %c0_10 = arith.constant 0 : index
    %24 = vector.load %arg4[%c0_9, %c0_10] : memref<2x14xf32, #tpu.memory_space<vmem>>, vector<2x14xf32>
    tpu.vector_store %arg4[%c0_9, %c0_10], %23 {strides = array<i32>} : memref<2x14xf32, #tpu.memory_space<vmem>>, vector<2x14xf32>,
    return
  }
  func.func @transform_0(%arg0: i32) -> i32 {
    %c0_i32 = arith.constant 0 : i32
    %c0_i32_0 = arith.constant 0 : i32
    return %c0_i32 : i32
  }
  func.func @transform_1(%arg0: i32) -> i32 {
    %c0_i32 = arith.constant 0 : i32
    %c0_i32_0 = arith.constant 0 : i32
    return %c0_i32 : i32
  }
  func.func @transform_2(%arg0: i32) -> (i32, i32) {
    %c0_i32 = arith.constant 0 : i32
    %c0_i32_0 = arith.constant 0 : i32
    return %arg0, %c0_i32 : i32, i32
  }
  func.func @transform_3(%arg0: i32) -> (i32, i32) {
    %c0_i32 = arith.constant 0 : i32
    %c0_i32_0 = arith.constant 0 : i32
    return %arg0, %c0_i32 : i32, i32
  }
}

</mosaic_0001>

<llo_original>
// kernel: tpu_custom_call.1
$region0: #{tpu_custom_call.1}
  #allocation0 [shape = 'u32[]', space=smem, size = 0x4, offset = 0x4, fixed_abs, tag = 'smem constant byte address 0x4 - core index']
  #allocation1 [shape = 'u32[144,128]{1,0:T(1,128)}', space=vmem, size = 0x12000, scoped, tag = 'internal scratch']
  #allocation2 [shape = 'f32[2,144]{1,0:T(2,128)}', space=vmem, size = 0x800, scoped, tag = 'scratch operand']
  #allocation3 [shape = 'f32[1]{0:T(128)S(6)}', space=smem, size = 0x200, scoped, tag = 'scoped memory for tpu_custom_call.1']
  %s0 = inlined_call_operand.vmem [shape: f32[3], index: 0, kind: input, shape index: {}]
  %s1 = inlined_call_operand.<no memory space> [shape: f32[1], index: 1, kind: input, shape index: {}]
  %s2 = inlined_call_operand.vmem [shape: f32[2,16], index: 2, kind: input, shape index: {}]
  %s3 = inlined_call_operand.hbm [shape: f32[2,14], index: 3, kind: output, shape index: {}]
  %s4 = sld [smem:[#allocation0]]
  $region26: #{tpu_custom_call.1} parent=0
    _
  %s6 = ssub.s32 1, %s4
  %s7 = scalar_select 0, %s6, %s4
  %8 = sst [smem:[#allocation3]] %s1
  $region1: #{tpu_custom_call.1} parent=0
    #allocation4 [shape = 'u8[512]{0}', space=smem, size = 0x200, scoped, tag = 'input window, operand 0, single buffered']
    #allocation5 [shape = 's32[1]{0}', space=sflag, size = 0x4, scoped, tag = 'scoped memory for tpu_custom_call.1']
    #allocation6 [shape = 's32[1]{0}', space=sflag, size = 0x4, scoped, tag = 'scoped memory for tpu_custom_call.1']
    #allocation7 [shape = 'u8[1024]{0}', space=vmem, size = 0x400, scoped, tag = 'output window, operand 0, single buffered']
    %9 = vsyncpa [#allocation6], 0
    %10 = vsyncpa [#allocation5], 0
    // Predicated region
    $region2: #{tpu_custom_call.1} parent=1 // pred_check
      _
    $region3: #{tpu_custom_call.1} parent=1 // pred_check_branch
      %12 = sbr.rel (0) target = $region5
    $region4: #{tpu_custom_call.1} parent=1 // pred_region
      %s14 = ssub.s32 16, 16
      %15 = vsyncadd [#allocation6], %s14
      %s17 = sshll.u32 %s0, 4
      %s18 = int_to_ptr.vmem [resolvable:$true] %s17
      %20 = dma.vmem_to_smem %s18, 16, [#allocation4], [#allocation6]
    $region5: #{tpu_custom_call.1} parent=1 // pred_fallthru
      _
    // Predicated region
    $region6: #{tpu_custom_call.1} parent=1 // pred_check
      _
    $region7: #{tpu_custom_call.1} parent=1 // pred_check_branch
      %22 = sbr.rel (0) target = $region9
    $region8: #{tpu_custom_call.1} parent=1 // pred_region
      _
    $region9: #{tpu_custom_call.1} parent=1 // pred_fallthru
      _
    // Predicated region
    $region10: #{tpu_custom_call.1} parent=1 // pred_check
      _
    $region11: #{tpu_custom_call.1} parent=1 // pred_check_branch
      %24 = sbr.rel (0) target = $region13
    $region12: #{tpu_custom_call.1} parent=1 // pred_region
      _
    $region13: #{tpu_custom_call.1} parent=1 // pred_fallthru
      _
    // Predicated region
    $region14: #{tpu_custom_call.1} parent=1 // pred_check
      _
    $region15: #{tpu_custom_call.1} parent=1 // pred_check_branch
      %26 = sbr.rel (0) target = $region17
    $region16: #{tpu_custom_call.1} parent=1 // pred_region
      %27 = dma.done [#allocation6], 16
    $region17: #{tpu_custom_call.1} parent=1 // pred_fallthru
      _
    %28 = sfence
    %v29 = vld [vmem:[%s2] sm:$0x3]
    %vm30 = vcmask 123904
    %31 = vst.msk [vmem:[#allocation2 + $0x2] sm:$0x3] %vm30, %v29
    %s32 = sld [smem:[#allocation4]]
    %s33 = sld [smem:[#allocation4 + $0x1]]
    %s34 = sld [smem:[#allocation4 + $0x2]]
    %v35 = vld [vmem:[%s2] sm:$0x3]
    %v36 = vld [vmem:[#allocation2] sm:$0xf]
    %v37 = vlaneseq
    %v38 = vand.u32 %v37, 127
    %vm39 = vcmp.ge.s32.totalorder %v38, 2
    %v42 = vunpack.c.l.s4 1983009808
    %v43 = vunpack.c.0.s8 %v42
    %v44 = vlaneseq
    %v45 = vshrl.u32 %v44, 7
    %v46 = vsub.s32 %v43, %v45
    %v47 = vrot.slane %v36, %v46
    %v48 = vcombine.high %v47, %v47
    %49 = vrot.lane.b32.xlu0 %v47, 2
    %v50 = vpop.permute.xlu0 %49
    %51 = vrot.lane.b32.xlu0 %v48, 2
    %v52 = vpop.permute.xlu0 %51
    %vm53 = vcmask 15360
    %v54 = vsel %vm53, %v50, %v52
    %v56 = vsel %vm39, %v54, 0.0
    %v57 = vstv %s32
    %v58 = vmul.f32 %v57, %v56
    %v59 = vstv %s33
    %v60 = vmul.f32 %v59, %v35
    %v61 = vadd.f32 %v58, %v60
    %v62 = vstv %s34
    %v63 = vmul.f32 %v62, %v35
    %65 = vrot.lane.b32.xlu0 %v63, 126
    %v66 = vpop.permute.xlu0 %65
    %v68 = vadd.f32 %v61, %v66
    %s69 = sld [smem:[#allocation3]]
    %v70 = vstv %s69
    %v71 = vadd.f32 %v68, %v70
    %vm72 = vcmask 107520
    %73 = vst.msk [vmem:[#allocation7] sm:$0x3] %vm72, %v71
    // Predicated region
    $region18: #{tpu_custom_call.1} parent=1 // pred_check
      _
    $region19: #{tpu_custom_call.1} parent=1 // pred_check_branch
      %75 = sbr.rel (0) target = $region21
    $region20: #{tpu_custom_call.1} parent=1 // pred_region
      %s77 = ssub.s32 32, 32
      %78 = vsyncadd [#allocation5], %s77
      %s80 = sshll.u32 [#allocation7], 4
      %s81 = int_to_ptr.vmem [resolvable:$true] %s80
      %83 = dma.vmem_to_hbm [thread:$0]  %s81, 32, %s3, [#allocation5]
    $region21: #{tpu_custom_call.1} parent=1 // pred_fallthru
      _
    // Predicated region
    $region22: #{tpu_custom_call.1} parent=1 // pred_check
      _
    $region23: #{tpu_custom_call.1} parent=1 // pred_check_branch
      %85 = sbr.rel (0) target = $region25
    $region24: #{tpu_custom_call.1} parent=1 // pred_region
      %86 = dma.done [#allocation5], 32
    $region25: #{tpu_custom_call.1} parent=1 // pred_fallthru
      _
    %87 = vsyncpa [#allocation5], 1
    %88 = vsyncpa [#allocation6], 1

</llo_original>
